<compile_context>
chip_gen: v7x
topology: tpu7x:2x2x1
jax: 0.10.0
libtpu: 0.0.40
codegen_flags: <defaults>
</compile_context>

<pallas_src>
import functools

import jax
import jax.numpy as jnp
from jax import lax
from jax.experimental import pallas as pl
from jax.experimental.pallas import tpu as pltpu


def mlp_critic_kernel(x_ref, w1_ref, b1_ref, w2_ref, b2_ref, w3_ref, b3_ref, o_ref):
    """Fused 3-layer MLP, batch-on-lanes compute layout.

    x_ref : (TB, D_in) f32        w1_ref: (H1, D_in) bf16   b1_ref: (H1, 1) f32
    w2_ref: (H2, H1)  bf16        b2_ref: (H2, 1)  f32
    w3_ref: (H2, 1)   f32         b3_ref: (1, 1)   f32 (SMEM scalar)
    o_ref : (1, TB)   f32
    """
    x = x_ref[...].astype(jnp.bfloat16)                                   # (TB, D_in)

    # Layer 1: contract d_in of w1 with d_in of x -> (H1, TB).  Batch ends up on lanes
    # without any host-side transpose of obs.
    h = lax.dot_general(
        w1_ref[...], x,
        dimension_numbers=(((1,), (1,)), ((), ())),
        preferred_element_type=jnp.float32,
    )
    h = jnp.maximum(h + b1_ref[...], 0.0)                                 # ReLU, f32 VPU

    # Layer 2: (H2, H1) @ (H1, TB) -> (H2, TB).
    h = jnp.dot(w2_ref[...], h.astype(jnp.bfloat16),
                preferred_element_type=jnp.float32)
    h = jnp.maximum(h + b2_ref[...], 0.0)                                 # ReLU, f32 VPU

    # Output layer (N=1): VPU multiply + sublane (XLU) reduce instead of a 1-wide matmul.
    z = jnp.sum(h * w3_ref[...], axis=0, keepdims=True) + b3_ref[0, 0]    # (1, TB)

    o_ref[...] = z                                                        # lane-dense store


@functools.partial(jax.jit, static_argnames=("tb",))
def mlp_critic_forward(obs, w1, b1, w2, b2, w3, b3, *, tb=512):
    """Returns shape (B,) — same as torch.squeeze(self.v_net(obs), -1)."""
    B, d_in = obs.shape
    h1 = w1.shape[0]
    h2 = w2.shape[0]

    # Effective batch tile: multiple of 128 (lane-dense output), capped so the batch grid
    # keeps >=2 steps when B allows it (lets v7x shard across both TensorCores).
    half_rounded = max(128, ((pl.cdiv(B, 2) + 127) // 128) * 128)
    tb_eff = min(tb, half_rounded)

    grid_steps = pl.cdiv(B, tb_eff)
    b_pad = grid_steps * tb_eff   # output allocated padded; padded lanes sliced off below

    out = pl.pallas_call(
        mlp_critic_kernel,
        out_shape=jax.ShapeDtypeStruct((1, b_pad), jnp.float32),
        grid=(grid_steps,),
        in_specs=[
            # obs tiled along batch (sublanes of the load); d_in equals the full dim so
            # the (8,128) block rule is satisfied.  Ragged last tile reads are clamped by
            # Pallas; garbage lanes are per-lane independent and sliced off at the end.
            pl.BlockSpec((tb_eff, d_in), lambda i: (i, 0)),
            # Weights / biases: constant index_map -> VMEM-resident across the grid.
            pl.BlockSpec((h1, d_in), lambda i: (0, 0)),
            pl.BlockSpec((h1, 1), lambda i: (0, 0)),
            pl.BlockSpec((h2, h1), lambda i: (0, 0)),
            pl.BlockSpec((h2, 1), lambda i: (0, 0)),
            pl.BlockSpec((h2, 1), lambda i: (0, 0)),
            # Scalar output bias lives in SMEM (no padded (8,128) VMEM tile for a scalar).
            pl.BlockSpec(memory_space=pltpu.MemorySpace.SMEM),
        ],
        out_specs=pl.BlockSpec((1, tb_eff), lambda i: (0, i)),
        compiler_params=pltpu.CompilerParams(
            dimension_semantics=("parallel",),   # batch tiles shard across TCs on v7x
        ),
    )(obs, w1, b1, w2, b2, w3, b3)

    return out[0, :B]


def init_linear_params(key, in_f, out_f, *, weight_dtype=jnp.float32):
    """Deterministic init mimicking torch.nn.Linear default (uniform(+-1/sqrt(in)))."""
    kw, kb = jax.random.split(key)
    bound = 1.0 / jnp.sqrt(jnp.float32(in_f))
    # Stored as (out, in) — same as torch.nn.Linear.weight.
    w = jax.random.uniform(kw, (out_f, in_f), jnp.float32, -bound, bound)
    b = jax.random.uniform(kb, (out_f, 1), jnp.float32, -bound, bound)
    return w.astype(weight_dtype), b


if __name__ == "__main__":
    # Synthetic MLPCritic: obs_dim=16, hidden_sizes=(32, 32), activation=ReLU.
    obs_dim = 16
    hidden = (32, 32)
    B = 1000          # not a multiple of the tile -> exercises ragged last input tile
    TB = 512          # 2 grid steps of 512 -> exercises grid + VMEM-resident weights

    key = jax.random.PRNGKey(0)
    k_x, k1, k2, k3 = jax.random.split(key, 4)

    # Hidden-layer weights in bf16 (MXU-native); biases + output layer f32.
    w1, b1 = init_linear_params(k1, obs_dim, hidden[0], weight_dtype=jnp.bfloat16)
    w2, b2 = init_linear_params(k2, hidden[0], hidden[1], weight_dtype=jnp.bfloat16)
    w3_row, b3 = init_linear_params(k3, hidden[1], 1, weight_dtype=jnp.float32)
    w3 = w3_row.reshape(hidden[1], 1)     # (H2, 1) column for the VPU-mul / XLU-reduce
    b3 = b3.reshape(1, 1)                 # (1, 1) SMEM scalar

    obs = jax.random.normal(k_x, (B, obs_dim), jnp.float32)

    v = mlp_critic_forward(obs, w1, b1, w2, b2, w3, b3, tb=TB)
    v = jax.block_until_ready(v)

    # Pure-JAX reference with matching bf16 matmul operands / f32 accumulation.
    # NOTE: bf16 MXU operands mean ~1e-3 relative error vs a pure-f32 torch MLPCritic.
    def ref(x):
        h = jnp.dot(x.astype(jnp.bfloat16), w1.T,
                    preferred_element_type=jnp.float32) + b1.T
        h = jnp.maximum(h, 0.0)
        h = jnp.dot(h.astype(jnp.bfloat16), w2.T,
                    preferred_element_type=jnp.float32) + b2.T
        h = jnp.maximum(h, 0.0)
        z = h @ w3 + b3[0, 0]             # (B, 1), Identity output activation
        return jnp.squeeze(z, -1)

    assert v.shape == (B,)
    assert jnp.allclose(v, ref(obs), atol=1e-3, rtol=1e-3)

    print("KERNEL_OK")
</pallas_src>

<mosaic_0001>
module attributes {stable_mosaic.version = 11 : i64} {
  func.func @mlp_critic_kernel(%arg0: i32, %arg1: memref<512x16xf32, #tpu.memory_space<vmem>>, %arg2: memref<32x16xbf16, #tpu.memory_space<vmem>>, %arg3: memref<32x1xf32, #tpu.memory_space<vmem>>, %arg4: memref<32x32xbf16, #tpu.memory_space<vmem>>, %arg5: memref<32x1xf32, #tpu.memory_space<vmem>>, %arg6: memref<32x1xf32, #tpu.memory_space<vmem>>, %arg7: memref<1x1xf32, #tpu.memory_space<smem>>, %arg8: memref<1x512xf32, #tpu.memory_space<vmem>>) attributes {dimension_semantics = [#tpu.dimension_semantics<parallel>], iteration_bounds = array<i64: 2>, scalar_prefetch = 0 : i64, scratch_operands = 0 : i64, tpu.core_type = #tpu.core_type<tc>, window_params = [{transform_indices = @transform_0, window_bounds = array<i64: 512, 16>}, {pipeline_mode = #tpu.pipeline_mode<synchronous>, transform_indices = @transform_1, window_bounds = array<i64: 32, 16>}, {pipeline_mode = #tpu.pipeline_mode<synchronous>, transform_indices = @transform_2, window_bounds = array<i64: 32, 1>}, {pipeline_mode = #tpu.pipeline_mode<synchronous>, transform_indices = @transform_3, window_bounds = array<i64: 32, 32>}, {pipeline_mode = #tpu.pipeline_mode<synchronous>, transform_indices = @transform_4, window_bounds = array<i64: 32, 1>}, {pipeline_mode = #tpu.pipeline_mode<synchronous>, transform_indices = @transform_5, window_bounds = array<i64: 32, 1>}, {transform_indices = @transform_6, window_bounds = array<i64: 1, 1>}, {transform_indices = @transform_7, window_bounds = array<i64: 1, 512>}]} {
    %c0 = arith.constant 0 : index
    %c0_0 = arith.constant 0 : index
    %0 = vector.load %arg1[%c0, %c0_0] : memref<512x16xf32, #tpu.memory_space<vmem>>, vector<512x16xf32>
    %1 = arith.truncf %0 : vector<512x16xf32> to vector<512x16xbf16>
    %c0_1 = arith.constant 0 : index
    %c0_2 = arith.constant 0 : index
    %2 = vector.load %arg2[%c0_1, %c0_2] : memref<32x16xbf16, #tpu.memory_space<vmem>>, vector<32x16xbf16>
    %cst = arith.constant dense<0.000000e+00> : vector<32x512xf32>
    %3 = tpu.matmul %2, %1, %cst {dimension_numbers = #tpu.dot_dimension_numbers<[1], [1], [0], [0], [0, 0, 1, 0], [], []>} : vector<32x16xbf16>, vector<512x16xbf16>, vector<32x512xf32> -> vector<32x512xf32>
    %c0_3 = arith.constant 0 : index
    %c0_4 = arith.constant 0 : index
    %4 = vector.load %arg3[%c0_3, %c0_4] : memref<32x1xf32, #tpu.memory_space<vmem>>, vector<32x1xf32>
    %5 = vector.broadcast %4 : vector<32x1xf32> to vector<32x512xf32>
    %6 = arith.addf %3, %5 : vector<32x512xf32>
    %cst_5 = arith.constant 0.000000e+00 : f32
    %7 = vector.broadcast %cst_5 : f32 to vector<32x512xf32>
    %8 = arith.maximumf %6, %7 : vector<32x512xf32>
    %c0_6 = arith.constant 0 : index
    %c0_7 = arith.constant 0 : index
    %9 = vector.load %arg4[%c0_6, %c0_7] : memref<32x32xbf16, #tpu.memory_space<vmem>>, vector<32x32xbf16>
    %10 = arith.truncf %8 : vector<32x512xf32> to vector<32x512xbf16>
    %cst_8 = arith.constant dense<0.000000e+00> : vector<32x512xf32>
    %11 = tpu.matmul %9, %10, %cst_8 {dimension_numbers = #tpu.dot_dimension_numbers<[1], [0], [0], [1], [0, 0, 1, 1], [], []>} : vector<32x32xbf16>, vector<32x512xbf16>, vector<32x512xf32> -> vector<32x512xf32>
    %c0_9 = arith.constant 0 : index
    %c0_10 = arith.constant 0 : index
    %12 = vector.load %arg5[%c0_9, %c0_10] : memref<32x1xf32, #tpu.memory_space<vmem>>, vector<32x1xf32>
    %13 = vector.broadcast %12 : vector<32x1xf32> to vector<32x512xf32>
    %14 = arith.addf %11, %13 : vector<32x512xf32>
    %cst_11 = arith.constant 0.000000e+00 : f32
    %15 = vector.broadcast %cst_11 : f32 to vector<32x512xf32>
    %16 = arith.maximumf %14, %15 : vector<32x512xf32>
    %c0_12 = arith.constant 0 : index
    %c0_13 = arith.constant 0 : index
    %17 = vector.load %arg6[%c0_12, %c0_13] : memref<32x1xf32, #tpu.memory_space<vmem>>, vector<32x1xf32>
    %18 = vector.broadcast %17 : vector<32x1xf32> to vector<32x512xf32>
    %19 = arith.mulf %16, %18 : vector<32x512xf32>
    %cst_14 = arith.constant dense<0.000000e+00> : vector<512xf32>
    %20 = vector.multi_reduction <add>, %19, %cst_14 [0] : vector<32x512xf32> to vector<512xf32>
    %21 = vector.shape_cast %20 : vector<512xf32> to vector<1x512xf32>
    %c0_15 = arith.constant 0 : index
    %c0_16 = arith.constant 0 : index
    %22 = memref.load %arg7[%c0_15, %c0_16] : memref<1x1xf32, #tpu.memory_space<smem>>
    %23 = vector.broadcast %22 : f32 to vector<1x512xf32>
    %24 = arith.addf %21, %23 : vector<1x512xf32>
    %c0_17 = arith.constant 0 : index
    %c0_18 = arith.constant 0 : index
    %25 = vector.load %arg8[%c0_17, %c0_18] : memref<1x512xf32, #tpu.memory_space<vmem>>, vector<1x512xf32>
    tpu.vector_store %arg8[%c0_17, %c0_18], %24 {strides = array<i32>} : memref<1x512xf32, #tpu.memory_space<vmem>>, vector<1x512xf32>,
    return
  }
  func.func @transform_0(%arg0: i32) -> (i32, i32) {
    %c0_i32 = arith.constant 0 : i32
    %c0_i32_0 = arith.constant 0 : i32
    return %arg0, %c0_i32 : i32, i32
  }
  func.func @transform_1(%arg0: i32) -> (i32, i32) {
    %c0_i32 = arith.constant 0 : i32
    %c0_i32_0 = arith.constant 0 : i32
    %c0_i32_1 = arith.constant 0 : i32
    return %c0_i32, %c0_i32_0 : i32, i32
  }
  func.func @transform_2(%arg0: i32) -> (i32, i32) {
    %c0_i32 = arith.constant 0 : i32
    %c0_i32_0 = arith.constant 0 : i32
    %c0_i32_1 = arith.constant 0 : i32
    return %c0_i32, %c0_i32_0 : i32, i32
  }
  func.func @transform_3(%arg0: i32) -> (i32, i32) {
    %c0_i32 = arith.constant 0 : i32
    %c0_i32_0 = arith.constant 0 : i32
    %c0_i32_1 = arith.constant 0 : i32
    return %c0_i32, %c0_i32_0 : i32, i32
  }
  func.func @transform_4(%arg0: i32) -> (i32, i32) {
    %c0_i32 = arith.constant 0 : i32
    %c0_i32_0 = arith.constant 0 : i32
    %c0_i32_1 = arith.constant 0 : i32
    return %c0_i32, %c0_i32_0 : i32, i32
  }
  func.func @transform_5(%arg0: i32) -> (i32, i32) {
    %c0_i32 = arith.constant 0 : i32
    %c0_i32_0 = arith.constant 0 : i32
    %c0_i32_1 = arith.constant 0 : i32
    return %c0_i32, %c0_i32_0 : i32, i32
  }
  func.func @transform_6(%arg0: i32) -> (i32, i32) {
    %c0_i32 = arith.constant 0 : i32
    %c0_i32_0 = arith.constant 0 : i32
    %c0_i32_1 = arith.constant 0 : i32
    return %c0_i32, %c0_i32_0 : i32, i32
  }
  func.func @transform_7(%arg0: i32) -> (i32, i32) {
    %c0_i32 = arith.constant 0 : i32
    %c0_i32_0 = arith.constant 0 : i32
    return %c0_i32, %arg0 : i32, i32
  }
}

</mosaic_0001>

<llo_original>
// kernel: mlp_critic_forward.1
$region0: #{mlp_critic_forward.1}
  #allocation0 [shape = 'u32[]', space=smem, size = 0x4, offset = 0x4, fixed_abs, tag = 'smem constant byte address 0x4 - core index']
  #allocation1 [shape = 'u32[144,128]{1,0:T(1,128)}', space=vmem, size = 0x12000, scoped, tag = 'internal scratch']
  #allocation2 [shape = 'f32[1,1]{1,0:T(1,128)S(6)}', space=smem, size = 0x200, scoped, tag = 'scoped memory for mlp_critic_forward.1']
  %s0 = inlined_call_operand.vmem [shape: f32[1000,16], index: 0, kind: input, shape index: {}]
  %s1 = inlined_call_operand.vmem [shape: bf16[32,16], index: 1, kind: input, shape index: {}]
  %s2 = inlined_call_operand.vmem [shape: f32[32,1], index: 2, kind: input, shape index: {}]
  %s3 = inlined_call_operand.vmem [shape: bf16[32,32], index: 3, kind: input, shape index: {}]
  %s4 = inlined_call_operand.vmem [shape: f32[32,1], index: 4, kind: input, shape index: {}]
  %s5 = inlined_call_operand.vmem [shape: f32[32,1], index: 5, kind: input, shape index: {}]
  %s6 = inlined_call_operand.<no memory space> [shape: f32[1,1], index: 6, kind: input, shape index: {}]
  %s7 = inlined_call_operand.hbm [shape: f32[1,1024], index: 7, kind: output, shape index: {}]
  %s8 = sld [smem:[#allocation0]]
  $region61: #{mlp_critic_forward.1} parent=0
    _
  %s10 = ssub.s32 1, %s8
  %s11 = scalar_select 0, %s10, %s8
  %12 = sst [smem:[#allocation2]] %s6
  $region1: #{mlp_critic_forward.1} parent=0
    #allocation3 [shape = 'u8[4096]{0}', space=vmem, size = 0x1000, scoped, tag = 'output window, operand 0']
    #allocation4 [shape = 's32[2]{0}', space=sflag, size = 0x8, scoped, tag = 'scoped memory for mlp_critic_forward.1']
    %13 = vsyncpa [#allocation4], 0
    %s14 = scalar_lea.sflag [#allocation4], 1
    %15 = vsyncpa %s14, 0
    loop: start=0, step=1, limit=4
    $region2: #{mlp_critic_forward.1} parent=1 // loop_pre_header
      _
    $region3: #{mlp_critic_forward.1} parent=1 // loop_header
      %s17 = sphi 0, %s21
      %p18 = scmp.ge.s32.totalorder %s17, 4
      %s27 = sphi 0, %s29
      %s30 = sphi 0, %s27
      %s31 = sphi 0, %s30
      %s47 = sphi 0, %s31
      %s51 = sphi 0, %s51
      %s53 = sphi 0, %s51
      %s54 = sphi 0, %s53
      %s68 = sphi 0, %s54
      %s72 = sphi 0, %s72
      %s74 = sphi 0, %s72
      %s75 = sphi 0, %s74
      %s89 = sphi 0, %s75
      %s93 = sphi 0, %s93
      %s95 = sphi 0, %s93
      %s96 = sphi 0, %s95
      %s110 = sphi 0, %s96
      %s114 = sphi 0, %s114
      %s116 = sphi 0, %s114
      %s117 = sphi 0, %s116
      %s131 = sphi 0, %s117
      %s135 = sphi 0, %s135
      %s137 = sphi 0, %s135
      %s138 = sphi 0, %s137
      %s152 = sphi 0, %s138
      %s156 = sphi 0, %s156
      %s158 = sphi 0, %s156
      %s159 = sphi 0, %s158
      %s173 = sphi 0, %s159
      %s179 = sphi 0, %s181
      %s182 = sphi 0, %s179
      %s183 = sphi 0, %s182
      %s199 = sphi 0, %s183
    $region4: #{mlp_critic_forward.1} parent=1 // loop_header_branch
      %20 = sbr.rel (%p18) target = $region8
    $region5: #{mlp_critic_forward.1} parent=1 // loop_body
      %s22 = ssub.s32 %s17, 1
      %s23 = ssub.s32 %s17, 2
      %s24 = sadd.s32 %s17, 1
      %s25 = ssub.s32 %s17, %s24
      %p26 = scmp.eq.s32.totalorder %s25, 0
      %s28 = sadd.s32 %s27, 1
      %s29 = scalar_select %p26, %s27, %s28
      %p32 = pneg %p26
      %p33 = scmp.eq.s32.totalorder %s17, 1
      %p34 = por %p32, %p33
      %p35 = scmp.ne.s32.totalorder %s27, %s30
      %p36 = scmp.eq.s32.totalorder %s17, 0
      %p37 = por %p35, %p36
      %p38 = scmp.ne.s32.totalorder %s27, %s30
      %p39 = scmp.eq.s32.totalorder %s22, 1
      %p40 = por %p38, %p39
      %p41 = scmp.ne.s32.totalorder %s30, %s31
      %p42 = scmp.eq.s32.totalorder %s22, 0
      %p43 = por %p41, %p42
      %p44 = scmp.ne.s32.totalorder %s30, %s31
      %p45 = scmp.eq.s32.totalorder %s23, 1
      %p46 = por %p44, %p45
      %p48 = scmp.ne.s32.totalorder %s31, %s47
      %p49 = scmp.eq.s32.totalorder %s23, 0
      %p50 = por %p48, %p49
      %s52 = sadd.s32 %s51, 1
      %p55 = scmp.eq.s32.totalorder %s17, 1
      %p56 = scmp.ne.s32.totalorder %s51, %s53
      %p57 = scmp.eq.s32.totalorder %s17, 0
      %p58 = por %p56, %p57
      %p59 = scmp.ne.s32.totalorder %s51, %s53
      %p60 = scmp.eq.s32.totalorder %s22, 1
      %p61 = por %p59, %p60
      %p62 = scmp.ne.s32.totalorder %s53, %s54
      %p63 = scmp.eq.s32.totalorder %s22, 0
      %p64 = por %p62, %p63
      %p65 = scmp.ne.s32.totalorder %s53, %s54
      %p66 = scmp.eq.s32.totalorder %s23, 1
      %p67 = por %p65, %p66
      %p69 = scmp.ne.s32.totalorder %s54, %s68
      %p70 = scmp.eq.s32.totalorder %s23, 0
      %p71 = por %p69, %p70
      %s73 = sadd.s32 %s72, 1
      %p76 = scmp.eq.s32.totalorder %s17, 1
      %p77 = scmp.ne.s32.totalorder %s72, %s74
      %p78 = scmp.eq.s32.totalorder %s17, 0
      %p79 = por %p77, %p78
      %p80 = scmp.ne.s32.totalorder %s72, %s74
      %p81 = scmp.eq.s32.totalorder %s22, 1
      %p82 = por %p80, %p81
      %p83 = scmp.ne.s32.totalorder %s74, %s75
      %p84 = scmp.eq.s32.totalorder %s22, 0
      %p85 = por %p83, %p84
      %p86 = scmp.ne.s32.totalorder %s74, %s75
      %p87 = scmp.eq.s32.totalorder %s23, 1
      %p88 = por %p86, %p87
      %p90 = scmp.ne.s32.totalorder %s75, %s89
      %p91 = scmp.eq.s32.totalorder %s23, 0
      %p92 = por %p90, %p91
      %s94 = sadd.s32 %s93, 1
      %p97 = scmp.eq.s32.totalorder %s17, 1
      %p98 = scmp.ne.s32.totalorder %s93, %s95
      %p99 = scmp.eq.s32.totalorder %s17, 0
      %p100 = por %p98, %p99
      %p101 = scmp.ne.s32.totalorder %s93, %s95
      %p102 = scmp.eq.s32.totalorder %s22, 1
      %p103 = por %p101, %p102
      %p104 = scmp.ne.s32.totalorder %s95, %s96
      %p105 = scmp.eq.s32.totalorder %s22, 0
      %p106 = por %p104, %p105
      %p107 = scmp.ne.s32.totalorder %s95, %s96
      %p108 = scmp.eq.s32.totalorder %s23, 1
      %p109 = por %p107, %p108
      %p111 = scmp.ne.s32.totalorder %s96, %s110
      %p112 = scmp.eq.s32.totalorder %s23, 0
      %p113 = por %p111, %p112
      %s115 = sadd.s32 %s114, 1
      %p118 = scmp.eq.s32.totalorder %s17, 1
      %p119 = scmp.ne.s32.totalorder %s114, %s116
      %p120 = scmp.eq.s32.totalorder %s17, 0
      %p121 = por %p119, %p120
      %p122 = scmp.ne.s32.totalorder %s114, %s116
      %p123 = scmp.eq.s32.totalorder %s22, 1
      %p124 = por %p122, %p123
      %p125 = scmp.ne.s32.totalorder %s116, %s117
      %p126 = scmp.eq.s32.totalorder %s22, 0
      %p127 = por %p125, %p126
      %p128 = scmp.ne.s32.totalorder %s116, %s117
      %p129 = scmp.eq.s32.totalorder %s23, 1
      %p130 = por %p128, %p129
      %p132 = scmp.ne.s32.totalorder %s117, %s131
      %p133 = scmp.eq.s32.totalorder %s23, 0
      %p134 = por %p132, %p133
      %s136 = sadd.s32 %s135, 1
      %p139 = scmp.eq.s32.totalorder %s17, 1
      %p140 = scmp.ne.s32.totalorder %s135, %s137
      %p141 = scmp.eq.s32.totalorder %s17, 0
      %p142 = por %p140, %p141
      %p143 = scmp.ne.s32.totalorder %s135, %s137
      %p144 = scmp.eq.s32.totalorder %s22, 1
      %p145 = por %p143, %p144
      %p146 = scmp.ne.s32.totalorder %s137, %s138
      %p147 = scmp.eq.s32.totalorder %s22, 0
      %p148 = por %p146, %p147
      %p149 = scmp.ne.s32.totalorder %s137, %s138
      %p150 = scmp.eq.s32.totalorder %s23, 1
      %p151 = por %p149, %p150
      %p153 = scmp.ne.s32.totalorder %s138, %s152
      %p154 = scmp.eq.s32.totalorder %s23, 0
      %p155 = por %p153, %p154
      %s157 = sadd.s32 %s156, 1
      %p160 = scmp.eq.s32.totalorder %s17, 1
      %p161 = scmp.ne.s32.totalorder %s156, %s158
      %p162 = scmp.eq.s32.totalorder %s17, 0
      %p163 = por %p161, %p162
      %p164 = scmp.ne.s32.totalorder %s156, %s158
      %p165 = scmp.eq.s32.totalorder %s22, 1
      %p166 = por %p164, %p165
      %p167 = scmp.ne.s32.totalorder %s158, %s159
      %p168 = scmp.eq.s32.totalorder %s22, 0
      %p169 = por %p167, %p168
      %p170 = scmp.ne.s32.totalorder %s158, %s159
      %p171 = scmp.eq.s32.totalorder %s23, 1
      %p172 = por %p170, %p171
      %p174 = scmp.ne.s32.totalorder %s159, %s173
      %p175 = scmp.eq.s32.totalorder %s23, 0
      %p176 = por %p174, %p175
      %s177 = ssub.s32 %s17, %s24
      %p178 = scmp.eq.s32.totalorder %s177, 0
      %s180 = sadd.s32 %s179, 1
      %s181 = scalar_select %p178, %s179, %s180
      %p184 = pneg %p178
      %p185 = scmp.eq.s32.totalorder %s17, 1
      %p186 = por %p184, %p185
      %p187 = scmp.ne.s32.totalorder %s179, %s182
      %p188 = scmp.eq.s32.totalorder %s17, 0
      %p189 = por %p187, %p188
      %p190 = scmp.ne.s32.totalorder %s179, %s182
      %p191 = scmp.eq.s32.totalorder %s22, 1
      %p192 = por %p190, %p191
      %p193 = scmp.ne.s32.totalorder %s182, %s183
      %p194 = scmp.eq.s32.totalorder %s22, 0
      %p195 = por %p193, %p194
      %p196 = scmp.ne.s32.totalorder %s182, %s183
      %p197 = scmp.eq.s32.totalorder %s23, 1
      %p198 = por %p196, %p197
      %p200 = scmp.ne.s32.totalorder %s183, %s199
      %p201 = scmp.eq.s32.totalorder %s23, 0
      %p202 = por %p200, %p201
      %p203 = scmp.le.s32.totalorder 1, %s17
      %p204 = scmp.lt.s32.totalorder %s17, 3
      %p205 = pnand %p203, %p204
      %p206 = pneg %p205
      // Predicated region
      $region9: #{mlp_critic_forward.1} parent=5 // pred_check
        _
      $region10: #{mlp_critic_forward.1} parent=5 // pred_check_branch
        %208 = sbr.rel (%p205) target = $region12
      $region11: #{mlp_critic_forward.1} parent=5 // pred_region
        %s209 = ssub.s32 %s17, 1
        // Predicated region
        $region13: #{mlp_critic_forward.1} parent=11 // pred_check
          %p210 = pneg %p64
        $region14: #{mlp_critic_forward.1} parent=11 // pred_check_branch
          %212 = sbr.rel (%p210) target = $region16
        $region15: #{mlp_critic_forward.1} parent=11 // pred_region
          _
        $region16: #{mlp_critic_forward.1} parent=11 // pred_fallthru
          _
        // Predicated region
        $region17: #{mlp_critic_forward.1} parent=11 // pred_check
          %p213 = pneg %p85
        $region18: #{mlp_critic_forward.1} parent=11 // pred_check_branch
          %215 = sbr.rel (%p213) target = $region20
        $region19: #{mlp_critic_forward.1} parent=11 // pred_region
          _
        $region20: #{mlp_critic_forward.1} parent=11 // pred_fallthru
          _
        // Predicated region
        $region21: #{mlp_critic_forward.1} parent=11 // pred_check
          %p216 = pneg %p106
        $region22: #{mlp_critic_forward.1} parent=11 // pred_check_branch
          %218 = sbr.rel (%p216) target = $region24
        $region23: #{mlp_critic_forward.1} parent=11 // pred_region
          _
        $region24: #{mlp_critic_forward.1} parent=11 // pred_fallthru
          _
        // Predicated region
        $region25: #{mlp_critic_forward.1} parent=11 // pred_check
          %p219 = pneg %p127
        $region26: #{mlp_critic_forward.1} parent=11 // pred_check_branch
          %221 = sbr.rel (%p219) target = $region28
        $region27: #{mlp_critic_forward.1} parent=11 // pred_region
          _
        $region28: #{mlp_critic_forward.1} parent=11 // pred_fallthru
          _
        // Predicated region
        $region29: #{mlp_critic_forward.1} parent=11 // pred_check
          %p222 = pneg %p148
        $region30: #{mlp_critic_forward.1} parent=11 // pred_check_branch
          %224 = sbr.rel (%p222) target = $region32
        $region31: #{mlp_critic_forward.1} parent=11 // pred_region
          _
        $region32: #{mlp_critic_forward.1} parent=11 // pred_fallthru
          _
        // Predicated region
        $region33: #{mlp_critic_forward.1} parent=11 // pred_check
          %p225 = pneg %p169
        $region34: #{mlp_critic_forward.1} parent=11 // pred_check_branch
          %227 = sbr.rel (%p225) target = $region36
        $region35: #{mlp_critic_forward.1} parent=11 // pred_region
          _
        $region36: #{mlp_critic_forward.1} parent=11 // pred_fallthru
          _
      $region12: #{mlp_critic_forward.1} parent=5 // pred_fallthru
        _
      %p228 = scmp.lt.s32.totalorder %s17, 2
      // Predicated region
      $region37: #{mlp_critic_forward.1} parent=5 // pred_check
        %p229 = pneg %p228
      $region38: #{mlp_critic_forward.1} parent=5 // pred_check_branch
        %231 = sbr.rel (%p229) target = $region40
      $region39: #{mlp_critic_forward.1} parent=5 // pred_region
        // Predicated region
        $region41: #{mlp_critic_forward.1} parent=39 // pred_check
          %p232 = pneg %p37
        $region42: #{mlp_critic_forward.1} parent=39 // pred_check_branch
          %234 = sbr.rel (%p232) target = $region44
        $region43: #{mlp_critic_forward.1} parent=39 // pred_region
          %s235 = smul.u32 64, %s17
          %s236 = ssub.s32 125, %s235
          %p237 = scmp.lt.s32.totalorder %s236, 64
          %s238 = scalar_select %p237, %s236, 64
          %s239 = smul.u32 128, %s238
          %p240 = scmp.lt.s32.totalorder %s235, 124
          %s241 = scalar_select %p240, %s235, 124
          %s242 = smul.addr %s241, 8
          %s243 = scalar_lea.vmem %s0, %s242
          %s244 = smul.u32 64, %s17
          %s245 = ssub.s32 125, %s244
          %p246 = scmp.lt.s32.totalorder %s245, 64
          %s247 = scalar_select %p246, %s245, 64
          %s248 = smul.u32 128, %s247
        $region44: #{mlp_critic_forward.1} parent=39 // pred_fallthru
          _
      $region40: #{mlp_critic_forward.1} parent=5 // pred_fallthru
        _
      %p249 = scmp.le.s32.totalorder 1, %s17
      %p250 = scmp.lt.s32.totalorder %s17, 3
      %p251 = pnand %p249, %p250
      %p252 = pneg %p251
      // Predicated region
      $region45: #{mlp_critic_forward.1} parent=5 // pred_check
        _
      $region46: #{mlp_critic_forward.1} parent=5 // pred_check_branch
        %254 = sbr.rel (%p251) target = $region48
      $region47: #{mlp_critic_forward.1} parent=5 // pred_region
        %s255 = ssub.s32 %s17, 1
        %s256 = smul.u32 64, %s22
        %s257 = ssub.s32 125, %s256
        %p258 = scmp.lt.s32.totalorder %s257, 64
        %s259 = scalar_select %p258, %s257, 64
        %s260 = smul.u32 128, %s259
        %p261 = scmp.lt.s32.totalorder %s256, 124
        %s262 = scalar_select %p261, %s256, 124
        %s263 = smul.addr %s262, 8
        %s264 = scalar_lea.vmem %s0, %s263
        %p265 = pneg %p43
        %p266 = pneg %p40
        %p267 = pneg %p64
        %p268 = pneg %p61
        %p269 = pneg %p85
        %p270 = pneg %p82
        %p271 = pneg %p106
        %p272 = pneg %p103
        %p273 = pneg %p127
        %p274 = pneg %p124
        %p275 = pneg %p148
        %p276 = pneg %p145
        %p277 = pneg %p169
        %p278 = pneg %p166
        %p279 = pneg %p195
        %p280 = pneg %p192
        %s281 = sand.u32 %s182, 1
        %s282 = scalar_lea.sflag [#allocation4], %s281
        %s283 = sand.u32 %s182, 1
        %s284 = smul.addr %s283, 4
        %s285 = scalar_lea.vmem [#allocation3], %s284
        %s286 = smul.u32 64, %s22
        %s287 = ssub.s32 125, %s286
        %p288 = scmp.lt.s32.totalorder %s287, 64
        %s289 = scalar_select %p288, %s287, 64
        %s290 = smul.u32 128, %s289
        %p291 = scmp.lt.s32.totalorder %s286, 124
        %s292 = scalar_select %p291, %s286, 124
        %s293 = smul.addr %s292, 8
        %s294 = scalar_lea.vmem %s0, %s293
        %s295 = smul.u32 64, %s22
        %s296 = ssub.s32 125, %s295
        %p297 = scmp.lt.s32.totalorder %s296, 64
        %s298 = scalar_select %p297, %s296, 64
        %s299 = smul.u32 128, %s298
        %s300 = smul.u32 4, %s22
        %v302 = vld [vmem:[%s294] sm:$0xff]
        %v303 = vld [vmem:[%s294 + $0x8] sm:$0xff]
        %v304 = vld [vmem:[%s294 + $0x10] sm:$0xff]
        %v305 = vld [vmem:[%s294 + $0x18] sm:$0xff]
        %v306 = vld [vmem:[%s294 + $0x20] sm:$0xff]
        %v307 = vld [vmem:[%s294 + $0x28] sm:$0xff]
        %v308 = vld [vmem:[%s294 + $0x30] sm:$0xff]
        %v309 = vld [vmem:[%s294 + $0x38] sm:$0xff]
        %v310 = vld [vmem:[%s294 + $0x40] sm:$0xff]
        %v311 = vld [vmem:[%s294 + $0x48] sm:$0xff]
        %v312 = vld [vmem:[%s294 + $0x50] sm:$0xff]
        %v313 = vld [vmem:[%s294 + $0x58] sm:$0xff]
        %v314 = vld [vmem:[%s294 + $0x60] sm:$0xff]
        %v315 = vld [vmem:[%s294 + $0x68] sm:$0xff]
        %v316 = vld [vmem:[%s294 + $0x70] sm:$0xff]
        %v317 = vld [vmem:[%s294 + $0x78] sm:$0xff]
        %v318 = vld [vmem:[%s294 + $0x80] sm:$0xff]
        %v319 = vld [vmem:[%s294 + $0x88] sm:$0xff]
        %v320 = vld [vmem:[%s294 + $0x90] sm:$0xff]
        %v321 = vld [vmem:[%s294 + $0x98] sm:$0xff]
        %v322 = vld [vmem:[%s294 + $0xa0] sm:$0xff]
        %v323 = vld [vmem:[%s294 + $0xa8] sm:$0xff]
        %v324 = vld [vmem:[%s294 + $0xb0] sm:$0xff]
        %v325 = vld [vmem:[%s294 + $0xb8] sm:$0xff]
        %v326 = vld [vmem:[%s294 + $0xc0] sm:$0xff]
        %v327 = vld [vmem:[%s294 + $0xc8] sm:$0xff]
        %v328 = vld [vmem:[%s294 + $0xd0] sm:$0xff]
        %v329 = vld [vmem:[%s294 + $0xd8] sm:$0xff]
        %v330 = vld [vmem:[%s294 + $0xe0] sm:$0xff]
        %v331 = vld [vmem:[%s294 + $0xe8] sm:$0xff]
        %v332 = vld [vmem:[%s294 + $0xf0] sm:$0xff]
        %v333 = vld [vmem:[%s294 + $0xf8] sm:$0xff]
        %v334 = vld [vmem:[%s294 + $0x100] sm:$0xff]
        %v335 = vld [vmem:[%s294 + $0x108] sm:$0xff]
        %v336 = vld [vmem:[%s294 + $0x110] sm:$0xff]
        %v337 = vld [vmem:[%s294 + $0x118] sm:$0xff]
        %v338 = vld [vmem:[%s294 + $0x120] sm:$0xff]
        %v339 = vld [vmem:[%s294 + $0x128] sm:$0xff]
        %v340 = vld [vmem:[%s294 + $0x130] sm:$0xff]
        %v341 = vld [vmem:[%s294 + $0x138] sm:$0xff]
        %v342 = vld [vmem:[%s294 + $0x140] sm:$0xff]
        %v343 = vld [vmem:[%s294 + $0x148] sm:$0xff]
        %v344 = vld [vmem:[%s294 + $0x150] sm:$0xff]
        %v345 = vld [vmem:[%s294 + $0x158] sm:$0xff]
        %v346 = vld [vmem:[%s294 + $0x160] sm:$0xff]
        %v347 = vld [vmem:[%s294 + $0x168] sm:$0xff]
        %v348 = vld [vmem:[%s294 + $0x170] sm:$0xff]
        %v349 = vld [vmem:[%s294 + $0x178] sm:$0xff]
        %v350 = vld [vmem:[%s294 + $0x180] sm:$0xff]
        %v351 = vld [vmem:[%s294 + $0x188] sm:$0xff]
        %v352 = vld [vmem:[%s294 + $0x190] sm:$0xff]
        %v353 = vld [vmem:[%s294 + $0x198] sm:$0xff]
        %v354 = vld [vmem:[%s294 + $0x1a0] sm:$0xff]
        %v355 = vld [vmem:[%s294 + $0x1a8] sm:$0xff]
        %v356 = vld [vmem:[%s294 + $0x1b0] sm:$0xff]
        %v357 = vld [vmem:[%s294 + $0x1b8] sm:$0xff]
        %v358 = vld [vmem:[%s294 + $0x1c0] sm:$0xff]
        %v359 = vld [vmem:[%s294 + $0x1c8] sm:$0xff]
        %v360 = vld [vmem:[%s294 + $0x1d0] sm:$0xff]
        %v361 = vld [vmem:[%s294 + $0x1d8] sm:$0xff]
        %v362 = vld [vmem:[%s294 + $0x1e0] sm:$0xff]
        %v363 = vld [vmem:[%s294 + $0x1e8] sm:$0xff]
        %v364 = vld [vmem:[%s294 + $0x1f0] sm:$0xff]
        %v365 = vld [vmem:[%s294 + $0x1f8] sm:$0xff]
        %v366 = vpack.c.bf16 %v303, %v302
        %v367 = vpack.c.bf16 %v305, %v304
        %v368 = vpack.c.bf16 %v307, %v306
        %v369 = vpack.c.bf16 %v309, %v308
        %v370 = vpack.c.bf16 %v311, %v310
        %v371 = vpack.c.bf16 %v313, %v312
        %v372 = vpack.c.bf16 %v315, %v314
        %v373 = vpack.c.bf16 %v317, %v316
        %v374 = vpack.c.bf16 %v319, %v318
        %v375 = vpack.c.bf16 %v321, %v320
        %v376 = vpack.c.bf16 %v323, %v322
        %v377 = vpack.c.bf16 %v325, %v324
        %v378 = vpack.c.bf16 %v327, %v326
        %v379 = vpack.c.bf16 %v329, %v328
        %v380 = vpack.c.bf16 %v331, %v330
        %v381 = vpack.c.bf16 %v333, %v332
        %v382 = vpack.c.bf16 %v335, %v334
        %v383 = vpack.c.bf16 %v337, %v336
        %v384 = vpack.c.bf16 %v339, %v338
        %v385 = vpack.c.bf16 %v341, %v340
        %v386 = vpack.c.bf16 %v343, %v342
        %v387 = vpack.c.bf16 %v345, %v344
        %v388 = vpack.c.bf16 %v347, %v346
        %v389 = vpack.c.bf16 %v349, %v348
        %v390 = vpack.c.bf16 %v351, %v350
        %v391 = vpack.c.bf16 %v353, %v352
        %v392 = vpack.c.bf16 %v355, %v354
        %v393 = vpack.c.bf16 %v357, %v356
        %v394 = vpack.c.bf16 %v359, %v358
        %v395 = vpack.c.bf16 %v361, %v360
        %v396 = vpack.c.bf16 %v363, %v362
        %v397 = vpack.c.bf16 %v365, %v364
        %v398 = vld [vmem:[%s1] sm:$0xf]
        %v399 = vld [vmem:[%s1 + $0x4] sm:$0xf]
        %v400 = vld [vmem:[%s1 + $0x8] sm:$0xf]
        %v401 = vld [vmem:[%s1 + $0xc] sm:$0xf]
        %v402 = vld [vmem:[%s2] sm:$0xff]
        %v403 = vld [vmem:[%s2 + $0x8] sm:$0xff]
        %v404 = vld [vmem:[%s2 + $0x10] sm:$0xff]
        %v405 = vld [vmem:[%s2 + $0x18] sm:$0xff]
        %407 = vset.pattern.permute.xlu0 0
        %408 = vperm.xlu0 %407, %v402
        %v409 = vpop.permute.xlu0 %408
        %412 = vset.pattern.permute.xlu0 0
        %413 = vperm.xlu0 %412, %v403
        %v414 = vpop.permute.xlu0 %413
        %417 = vset.pattern.permute.xlu0 0
        %418 = vperm.xlu0 %417, %v404
        %v419 = vpop.permute.xlu0 %418
        %422 = vset.pattern.permute.xlu0 0
        %423 = vperm.xlu0 %422, %v405
        %v424 = vpop.permute.xlu0 %423
        %v430 = vunpack.c.l.b16 %v398
        %v431 = vunpack.c.l.b16 %v399
        %v432 = vunpack.c.l.b16 %v400
        %v433 = vunpack.c.l.b16 %v401
        %v434 = vpack.c.b16 %v431, %v430
        %v435 = vpack.c.b16 %v433, %v432
        %vm436 = vcmask 130048
        %v438 = vsel %vm436, %v434, 0
        %v441 = vsel %vm436, %v435, 0
        %v444 = vsel %vm436, %v366, 0
        %v447 = vsel %vm436, %v367, 0
        %v450 = vsel %vm436, %v368, 0
        %v453 = vsel %vm436, %v369, 0
        %v456 = vsel %vm436, %v370, 0
        %v459 = vsel %vm436, %v371, 0
        %v462 = vsel %vm436, %v372, 0
        %v465 = vsel %vm436, %v373, 0
        %v468 = vsel %vm436, %v374, 0
        %v471 = vsel %vm436, %v375, 0
        %v474 = vsel %vm436, %v376, 0
        %v477 = vsel %vm436, %v377, 0
        %v480 = vsel %vm436, %v378, 0
        %v483 = vsel %vm436, %v379, 0
        %v486 = vsel %vm436, %v380, 0
        %v489 = vsel %vm436, %v381, 0
        %v492 = vsel %vm436, %v382, 0
        %v495 = vsel %vm436, %v383, 0
        %v498 = vsel %vm436, %v384, 0
        %v501 = vsel %vm436, %v385, 0
        %v504 = vsel %vm436, %v386, 0
        %v507 = vsel %vm436, %v387, 0
        %v510 = vsel %vm436, %v388, 0
        %v513 = vsel %vm436, %v389, 0
        %v516 = vsel %vm436, %v390, 0
        %v519 = vsel %vm436, %v391, 0
        %v522 = vsel %vm436, %v392, 0
        %v525 = vsel %vm436, %v393, 0
        %v528 = vsel %vm436, %v394, 0
        %v531 = vsel %vm436, %v395, 0
        %v534 = vsel %vm436, %v396, 0
        %v537 = vsel %vm436, %v397, 0
        %539 = vmatprep.subr.bf16.mxu0 0
        %540 = vmatpush1.bf16.xpose.msra.mxu0 %v444
        %541 = vmatprep.subr.bf16.mxu0 0
        %542 = vmatpush1.bf16.xpose.msra.mxu0 %v447
        %543 = vmatprep.subr.bf16.mxu0 0
        %544 = vmatpush1.bf16.xpose.msra.mxu0 %v450
        %545 = vmatprep.subr.bf16.mxu0 0
        %546 = vmatpush1.bf16.xpose.msra.mxu0 %v453
        %547 = vmatprep.subr.bf16.mxu0 0
        %548 = vmatpush1.bf16.xpose.msra.mxu0 %v456
        %549 = vmatprep.subr.bf16.mxu0 0
        %550 = vmatpush1.bf16.xpose.msra.mxu0 %v459
        %551 = vmatprep.subr.bf16.mxu0 0
        %552 = vmatpush1.bf16.xpose.msra.mxu0 %v462
        %553 = vmatprep.subr.bf16.mxu0 0
        %554 = vmatpush1.bf16.xpose.msra.mxu0 %v465
        %555 = vmatprep.subr.bf16.mxu0 0
        %556 = vmatpush1.bf16.xpose.msra.mxu0 %v468
        %557 = vmatprep.subr.bf16.mxu0 0
        %558 = vmatpush1.bf16.xpose.msra.mxu0 %v471
        %559 = vmatprep.subr.bf16.mxu0 0
        %560 = vmatpush1.bf16.xpose.msra.mxu0 %v474
        %561 = vmatprep.subr.bf16.mxu0 0
        %562 = vmatpush1.bf16.xpose.msra.mxu0 %v477
        %563 = vmatprep.subr.bf16.mxu0 0
        %564 = vmatpush1.bf16.xpose.msra.mxu0 %v480
        %565 = vmatprep.subr.bf16.mxu0 0
        %566 = vmatpush1.bf16.xpose.msra.mxu0 %v483
        %567 = vmatprep.subr.bf16.mxu0 0
        %568 = vmatpush1.bf16.xpose.msra.mxu0 %v486
        %569 = vmatprep.subr.bf16.mxu0 0
        %570 = vmatpush1.bf16.xpose.msra.mxu0 %v489
        %571 = vmatprep.mubr.bf16.mxu0 0
        %572 = vmatmul.mubr.bf16.gmra.mrb[0].mxu0 %v438
        %v573 = vpop.f32.mrb[0].mxu0
        %v574 = vadd.f32 %v409, %v573
        %v575 = vpop.f32.mrb[0].mxu0
        %v576 = vadd.f32 %v409, %v575
        %v577 = vpop.f32.mrb[0].mxu0
        %v578 = vadd.f32 %v414, %v577
        %v579 = vpop.f32.mrb[0].mxu0
        %v580 = vadd.f32 %v414, %v579
        %581 = vmatprep.mubr.bf16.mxu0 0
        %582 = vmatmul.mubr.bf16.gmra.mrb[0].mxu0 %v441
        %v583 = vpop.f32.mrb[0].mxu0
        %v584 = vadd.f32 %v419, %v583
        %v585 = vpop.f32.mrb[0].mxu0
        %v586 = vadd.f32 %v419, %v585
        %v587 = vpop.f32.mrb[0].mxu0
        %v588 = vadd.f32 %v424, %v587
        %v589 = vpop.f32.mrb[0].mxu0
        %v590 = vadd.f32 %v424, %v589
        %591 = vdwg.mxu0
        %592 = vmatprep.subr.bf16.mxu0 0
        %593 = vmatpush1.bf16.xpose.msra.mxu0 %v492
        %594 = vmatprep.subr.bf16.mxu0 0
        %595 = vmatpush1.bf16.xpose.msra.mxu0 %v495
        %596 = vmatprep.subr.bf16.mxu0 0
        %597 = vmatpush1.bf16.xpose.msra.mxu0 %v498
        %598 = vmatprep.subr.bf16.mxu0 0
        %599 = vmatpush1.bf16.xpose.msra.mxu0 %v501
        %600 = vmatprep.subr.bf16.mxu0 0
        %601 = vmatpush1.bf16.xpose.msra.mxu0 %v504
        %602 = vmatprep.subr.bf16.mxu0 0
        %603 = vmatpush1.bf16.xpose.msra.mxu0 %v507
        %604 = vmatprep.subr.bf16.mxu0 0
        %605 = vmatpush1.bf16.xpose.msra.mxu0 %v510
        %606 = vmatprep.subr.bf16.mxu0 0
        %607 = vmatpush1.bf16.xpose.msra.mxu0 %v513
        %608 = vmatprep.subr.bf16.mxu0 0
        %609 = vmatpush1.bf16.xpose.msra.mxu0 %v516
        %610 = vmatprep.subr.bf16.mxu0 0
        %611 = vmatpush1.bf16.xpose.msra.mxu0 %v519
        %612 = vmatprep.subr.bf16.mxu0 0
        %613 = vmatpush1.bf16.xpose.msra.mxu0 %v522
        %614 = vmatprep.subr.bf16.mxu0 0
        %615 = vmatpush1.bf16.xpose.msra.mxu0 %v525
        %616 = vmatprep.subr.bf16.mxu0 0
        %617 = vmatpush1.bf16.xpose.msra.mxu0 %v528
        %618 = vmatprep.subr.bf16.mxu0 0
        %619 = vmatpush1.bf16.xpose.msra.mxu0 %v531
        %620 = vmatprep.subr.bf16.mxu0 0
        %621 = vmatpush1.bf16.xpose.msra.mxu0 %v534
        %622 = vmatprep.subr.bf16.mxu0 0
        %623 = vmatpush1.bf16.xpose.msra.mxu0 %v537
        %624 = vmatprep.mubr.bf16.mxu0 0
        %625 = vmatmul.mubr.bf16.gmra.mrb[0].mxu0 %v438
        %v626 = vpop.f32.mrb[0].mxu0
        %v627 = vadd.f32 %v409, %v626
        %v628 = vpop.f32.mrb[0].mxu0
        %v629 = vadd.f32 %v409, %v628
        %v630 = vpop.f32.mrb[0].mxu0
        %v631 = vadd.f32 %v414, %v630
        %v632 = vpop.f32.mrb[0].mxu0
        %v633 = vadd.f32 %v414, %v632
        %634 = vmatprep.mubr.bf16.mxu0 0
        %635 = vmatmul.mubr.bf16.gmra.mrb[0].mxu0 %v441
        %v636 = vpop.f32.mrb[0].mxu0
        %v637 = vadd.f32 %v419, %v636
        %v638 = vpop.f32.mrb[0].mxu0
        %v639 = vadd.f32 %v419, %v638
        %v640 = vpop.f32.mrb[0].mxu0
        %v641 = vadd.f32 %v424, %v640
        %v642 = vpop.f32.mrb[0].mxu0
        %v643 = vadd.f32 %v424, %v642
        %644 = vdwg.mxu0
        %v645 = vmax.f32 %v574, 0.0
        %v646 = vmax.f32 %v576, 0.0
        %v647 = vmax.f32 %v627, 0.0
        %v648 = vmax.f32 %v629, 0.0
        %v649 = vmax.f32 %v578, 0.0
        %v650 = vmax.f32 %v580, 0.0
        %v651 = vmax.f32 %v631, 0.0
        %v652 = vmax.f32 %v633, 0.0
        %v653 = vmax.f32 %v584, 0.0
        %v654 = vmax.f32 %v586, 0.0
        %v655 = vmax.f32 %v637, 0.0
        %v656 = vmax.f32 %v639, 0.0
        %v657 = vmax.f32 %v588, 0.0
        %v658 = vmax.f32 %v590, 0.0
        %v659 = vmax.f32 %v641, 0.0
        %v660 = vmax.f32 %v643, 0.0
        %v661 = vld [vmem:[%s3] sm:$0xf]
        %v662 = vld [vmem:[%s3 + $0x4] sm:$0xf]
        %v663 = vld [vmem:[%s3 + $0x8] sm:$0xf]
        %v664 = vld [vmem:[%s3 + $0xc] sm:$0xf]
        %v665 = vpack.c.bf16 %v649, %v645
        %v666 = vpack.c.bf16 %v650, %v646
        %v667 = vpack.c.bf16 %v651, %v647
        %v668 = vpack.c.bf16 %v652, %v648
        %v669 = vpack.c.bf16 %v657, %v653
        %v670 = vpack.c.bf16 %v658, %v654
        %v671 = vpack.c.bf16 %v659, %v655
        %v672 = vpack.c.bf16 %v660, %v656
        %v673 = vld [vmem:[%s4] sm:$0xff]
        %v674 = vld [vmem:[%s4 + $0x8] sm:$0xff]
        %v675 = vld [vmem:[%s4 + $0x10] sm:$0xff]
        %v676 = vld [vmem:[%s4 + $0x18] sm:$0xff]
        %678 = vset.pattern.permute.xlu0 0
        %679 = vperm.xlu0 %678, %v673
        %v680 = vpop.permute.xlu0 %679
        %683 = vset.pattern.permute.xlu0 0
        %684 = vperm.xlu0 %683, %v674
        %v685 = vpop.permute.xlu0 %684
        %688 = vset.pattern.permute.xlu0 0
        %689 = vperm.xlu0 %688, %v675
        %v690 = vpop.permute.xlu0 %689
        %693 = vset.pattern.permute.xlu0 0
        %694 = vperm.xlu0 %693, %v676
        %v695 = vpop.permute.xlu0 %694
        %v701 = vunpack.c.l.b16 %v661
        %v702 = vunpack.c.l.b16 %v662
        %v703 = vunpack.c.l.b16 %v663
        %v704 = vunpack.c.l.b16 %v664
        %v705 = vpack.c.b16 %v702, %v701
        %v706 = vpack.c.b16 %v704, %v703
        %vm707 = vcmask 261120
        %v709 = vsel %vm707, %v705, 0
        %v712 = vsel %vm707, %v706, 0
        %714 = vmatprep.subr.bf16.mxu0 %v666
        %715 = vmatpush1.bf16.msra.mxu0 %v665
        %716 = vmatprep.subr.bf16.mxu0 %v670
        %717 = vmatpush1.bf16.msra.mxu0 %v669
        %718 = vmatprep.subr.bf16.mxu0 0
        %719 = vmatpush1.bf16.msra.mxu0 0
        %720 = vmatprep.subr.bf16.mxu0 0
        %721 = vmatpush1.bf16.msra.mxu0 0
        %722 = vmatprep.subr.bf16.mxu0 0
        %723 = vmatpush1.bf16.msra.mxu0 0
        %724 = vmatprep.subr.bf16.mxu0 0
        %725 = vmatpush1.bf16.msra.mxu0 0
        %726 = vmatprep.subr.bf16.mxu0 0
        %727 = vmatpush1.bf16.msra.mxu0 0
        %728 = vmatprep.subr.bf16.mxu0 0
        %729 = vmatpush1.bf16.msra.mxu0 0
        %730 = vmatprep.subr.bf16.mxu0 0
        %731 = vmatpush1.bf16.msra.mxu0 0
        %732 = vmatprep.subr.bf16.mxu0 0
        %733 = vmatpush1.bf16.msra.mxu0 0
        %734 = vmatprep.subr.bf16.mxu0 0
        %735 = vmatpush1.bf16.msra.mxu0 0
        %736 = vmatprep.subr.bf16.mxu0 0
        %737 = vmatpush1.bf16.msra.mxu0 0
        %738 = vmatprep.subr.bf16.mxu0 0
        %739 = vmatpush1.bf16.msra.mxu0 0
        %740 = vmatprep.subr.bf16.mxu0 0
        %741 = vmatpush1.bf16.msra.mxu0 0
        %742 = vmatprep.subr.bf16.mxu0 0
        %743 = vmatpush1.bf16.msra.mxu0 0
        %744 = vmatprep.subr.bf16.mxu0 0
        %745 = vmatpush1.bf16.msra.mxu0 0
        %746 = vmatprep.mubr.bf16.mxu0 0
        %747 = vmatmul.mubr.bf16.gmra.mrb[0].mxu0 %v709
        %v748 = vpop.f32.mrb[0].mxu0
        %v749 = vadd.f32 %v680, %v748
        %v750 = vpop.f32.mrb[0].mxu0
        %v751 = vadd.f32 %v680, %v750
        %v752 = vpop.f32.mrb[0].mxu0
        %v753 = vadd.f32 %v685, %v752
        %v754 = vpop.f32.mrb[0].mxu0
        %v755 = vadd.f32 %v685, %v754
        %756 = vmatprep.mubr.bf16.mxu0 0
        %757 = vmatmul.mubr.bf16.gmra.mrb[0].mxu0 %v712
        %v758 = vpop.f32.mrb[0].mxu0
        %v759 = vadd.f32 %v690, %v758
        %v760 = vpop.f32.mrb[0].mxu0
        %v761 = vadd.f32 %v690, %v760
        %v762 = vpop.f32.mrb[0].mxu0
        %v763 = vadd.f32 %v695, %v762
        %v764 = vpop.f32.mrb[0].mxu0
        %v765 = vadd.f32 %v695, %v764
        %766 = vdwg.mxu0
        %767 = vmatprep.subr.bf16.mxu0 %v668
        %768 = vmatpush1.bf16.msra.mxu0 %v667
        %769 = vmatprep.subr.bf16.mxu0 %v672
        %770 = vmatpush1.bf16.msra.mxu0 %v671
        %771 = vmatprep.subr.bf16.mxu0 0
        %772 = vmatpush1.bf16.msra.mxu0 0
        %773 = vmatprep.subr.bf16.mxu0 0
        %774 = vmatpush1.bf16.msra.mxu0 0
        %775 = vmatprep.subr.bf16.mxu0 0
        %776 = vmatpush1.bf16.msra.mxu0 0
        %777 = vmatprep.subr.bf16.mxu0 0
        %778 = vmatpush1.bf16.msra.mxu0 0
        %779 = vmatprep.subr.bf16.mxu0 0
        %780 = vmatpush1.bf16.msra.mxu0 0
        %781 = vmatprep.subr.bf16.mxu0 0
        %782 = vmatpush1.bf16.msra.mxu0 0
        %783 = vmatprep.subr.bf16.mxu0 0
        %784 = vmatpush1.bf16.msra.mxu0 0
        %785 = vmatprep.subr.bf16.mxu0 0
        %786 = vmatpush1.bf16.msra.mxu0 0
        %787 = vmatprep.subr.bf16.mxu0 0
        %788 = vmatpush1.bf16.msra.mxu0 0
        %789 = vmatprep.subr.bf16.mxu0 0
        %790 = vmatpush1.bf16.msra.mxu0 0
        %791 = vmatprep.subr.bf16.mxu0 0
        %792 = vmatpush1.bf16.msra.mxu0 0
        %793 = vmatprep.subr.bf16.mxu0 0
        %794 = vmatpush1.bf16.msra.mxu0 0
        %795 = vmatprep.subr.bf16.mxu0 0
        %796 = vmatpush1.bf16.msra.mxu0 0
        %797 = vmatprep.subr.bf16.mxu0 0
        %798 = vmatpush1.bf16.msra.mxu0 0
        %799 = vmatprep.mubr.bf16.mxu0 0
        %800 = vmatmul.mubr.bf16.gmra.mrb[0].mxu0 %v709
        %v801 = vpop.f32.mrb[0].mxu0
        %v802 = vadd.f32 %v680, %v801
        %v803 = vpop.f32.mrb[0].mxu0
        %v804 = vadd.f32 %v680, %v803
        %v805 = vpop.f32.mrb[0].mxu0
        %v806 = vadd.f32 %v685, %v805
        %v807 = vpop.f32.mrb[0].mxu0
        %v808 = vadd.f32 %v685, %v807
        %809 = vmatprep.mubr.bf16.mxu0 0
        %810 = vmatmul.mubr.bf16.gmra.mrb[0].mxu0 %v712
        %v811 = vpop.f32.mrb[0].mxu0
        %v812 = vadd.f32 %v690, %v811
        %v813 = vpop.f32.mrb[0].mxu0
        %v814 = vadd.f32 %v690, %v813
        %v815 = vpop.f32.mrb[0].mxu0
        %v816 = vadd.f32 %v695, %v815
        %v817 = vpop.f32.mrb[0].mxu0
        %v818 = vadd.f32 %v695, %v817
        %819 = vdwg.mxu0
        %v820 = vmax.f32 %v749, 0.0
        %v821 = vmax.f32 %v751, 0.0
        %v822 = vmax.f32 %v802, 0.0
        %v823 = vmax.f32 %v804, 0.0
        %v824 = vmax.f32 %v753, 0.0
        %v825 = vmax.f32 %v755, 0.0
        %v826 = vmax.f32 %v806, 0.0
        %v827 = vmax.f32 %v808, 0.0
        %v828 = vmax.f32 %v759, 0.0
        %v829 = vmax.f32 %v761, 0.0
        %v830 = vmax.f32 %v812, 0.0
        %v831 = vmax.f32 %v814, 0.0
        %v832 = vmax.f32 %v763, 0.0
        %v833 = vmax.f32 %v765, 0.0
        %v834 = vmax.f32 %v816, 0.0
        %v835 = vmax.f32 %v818, 0.0
        %v836 = vld [vmem:[%s5] sm:$0xff]
        %v837 = vld [vmem:[%s5 + $0x8] sm:$0xff]
        %v838 = vld [vmem:[%s5 + $0x10] sm:$0xff]
        %v839 = vld [vmem:[%s5 + $0x18] sm:$0xff]
        %841 = vset.pattern.permute.xlu0 0
        %842 = vperm.xlu0 %841, %v836
        %v843 = vpop.permute.xlu0 %842
        %846 = vset.pattern.permute.xlu0 0
        %847 = vperm.xlu0 %846, %v837
        %v848 = vpop.permute.xlu0 %847
        %851 = vset.pattern.permute.xlu0 0
        %852 = vperm.xlu0 %851, %v838
        %v853 = vpop.permute.xlu0 %852
        %856 = vset.pattern.permute.xlu0 0
        %857 = vperm.xlu0 %856, %v839
        %v858 = vpop.permute.xlu0 %857
        %v860 = vmul.f32 %v820, %v843
        %v861 = vmul.f32 %v821, %v843
        %v862 = vmul.f32 %v822, %v843
        %v863 = vmul.f32 %v823, %v843
        %v864 = vmul.f32 %v824, %v848
        %v865 = vmul.f32 %v825, %v848
        %v866 = vmul.f32 %v826, %v848
        %v867 = vmul.f32 %v827, %v848
        %v868 = vmul.f32 %v828, %v853
        %v869 = vmul.f32 %v829, %v853
        %v870 = vmul.f32 %v830, %v853
        %v871 = vmul.f32 %v831, %v853
        %v872 = vmul.f32 %v832, %v858
        %v873 = vmul.f32 %v833, %v858
        %v874 = vmul.f32 %v834, %v858
        %v875 = vmul.f32 %v835, %v858
        %v876 = vadd.f32 %v860, %v864
        %v877 = vadd.f32 %v876, %v868
        %v878 = vadd.f32 %v877, %v872
        %v879 = vrot.slane %v878, 4
        %v880 = vadd.f32 %v878, %v879
        %v881 = vrot.slane %v880, 2
        %v882 = vadd.f32 %v880, %v881
        %v883 = vrot.slane %v882, 1
        %v884 = vadd.f32 %v882, %v883
        %v885 = vadd.f32 %v861, %v865
        %v886 = vadd.f32 %v885, %v869
        %v887 = vadd.f32 %v886, %v873
        %v888 = vrot.slane %v887, 4
        %v889 = vadd.f32 %v887, %v888
        %v890 = vrot.slane %v889, 2
        %v891 = vadd.f32 %v889, %v890
        %v892 = vrot.slane %v891, 1
        %v893 = vadd.f32 %v891, %v892
        %v894 = vadd.f32 %v862, %v866
        %v895 = vadd.f32 %v894, %v870
        %v896 = vadd.f32 %v895, %v874
        %v897 = vrot.slane %v896, 4
        %v898 = vadd.f32 %v896, %v897
        %v899 = vrot.slane %v898, 2
        %v900 = vadd.f32 %v898, %v899
        %v901 = vrot.slane %v900, 1
        %v902 = vadd.f32 %v900, %v901
        %v903 = vadd.f32 %v863, %v867
        %v904 = vadd.f32 %v903, %v871
        %v905 = vadd.f32 %v904, %v875
        %v906 = vrot.slane %v905, 4
        %v907 = vadd.f32 %v905, %v906
        %v908 = vrot.slane %v907, 2
        %v909 = vadd.f32 %v907, %v908
        %v910 = vrot.slane %v909, 1
        %v911 = vadd.f32 %v909, %v910
        %s912 = sld [smem:[#allocation2]]
        %v913 = vstv %s912
        %v914 = vadd.f32 %v884, %v913
        %v915 = vadd.f32 %v893, %v913
        %v916 = vadd.f32 %v902, %v913
        %v917 = vadd.f32 %v911, %v913
        %v922 = vcombine.low %v914, %v915
        %v923 = vcombine.low %v916, %v917
        %v925 = vunpack.c.l.s4 1966171168
        %v926 = vunpack.c.0.s8 %v925
        %v927 = vlaneseq
        %v928 = vshrl.u32 %v927, 7
        %v929 = vsub.s32 %v926, %v928
        %v930 = vrot.slane %v922, %v929
        %v932 = vunpack.c.l.s4 1966171168
        %v933 = vunpack.c.0.s8 %v932
        %v934 = vlaneseq
        %v935 = vshrl.u32 %v934, 7
        %v936 = vsub.s32 %v933, %v935
        %v937 = vrot.slane %v923, %v936
        %v938 = vcombine.low %v930, %v937
        %v940 = vunpack.c.l.s4 1966171168
        %v941 = vunpack.c.0.s8 %v940
        %v942 = vlaneseq
        %v943 = vshrl.u32 %v942, 7
        %v944 = vsub.s32 %v941, %v943
        %v945 = vrot.slane %v938, %v944
        %v947 = vlaneseq
        %vm948 = vcmp.ge.s32.totalorder %v947, 0
        %vm949 = vcmp.lt.s32.totalorder %v947, 512
        %vm950 = vmand %vm948, %vm949
        %951 = vst.msk [vmem:[%s285] sm:$0xf] %vm950, %v945
        %s952 = sand.u32 %s182, 1
        %s953 = scalar_lea.sflag [#allocation4], %s952
        %s954 = sand.u32 %s182, 1
        %s955 = smul.addr %s954, 4
        %s956 = scalar_lea.vmem [#allocation3], %s955
        // Predicated region
        $region49: #{mlp_critic_forward.1} parent=47 // pred_check
          %p957 = pneg %p192
        $region50: #{mlp_critic_forward.1} parent=47 // pred_check_branch
          %959 = sbr.rel (%p957) target = $region52
        $region51: #{mlp_critic_forward.1} parent=47 // pred_region
          %s960 = smul.u32 4, %s22
          %s962 = ssub.s32 64, 64
          %963 = vsyncadd %s953, %s962
          %s964 = smul.addr %s960, 16
          %s965 = scalar_lea.hbm %s7, %s964
          %s967 = sshll.u32 %s956, 4
          %s968 = int_to_ptr.vmem [resolvable:$true] %s967
          %970 = dma.vmem_to_hbm [thread:$0]  %s968, 64, %s965, %s953
        $region52: #{mlp_critic_forward.1} parent=47 // pred_fallthru
          _
      $region48: #{mlp_critic_forward.1} parent=5 // pred_fallthru
        _
      %p971 = scmp.le.s32.totalorder 2, %s17
      // Predicated region
      $region53: #{mlp_critic_forward.1} parent=5 // pred_check
        %p972 = pneg %p971
      $region54: #{mlp_critic_forward.1} parent=5 // pred_check_branch
        %974 = sbr.rel (%p972) target = $region56
      $region55: #{mlp_critic_forward.1} parent=5 // pred_region
        %s975 = ssub.s32 %s17, 2
        // Predicated region
        $region57: #{mlp_critic_forward.1} parent=55 // pred_check
          %p976 = pneg %p198
        $region58: #{mlp_critic_forward.1} parent=55 // pred_check_branch
          %978 = sbr.rel (%p976) target = $region60
        $region59: #{mlp_critic_forward.1} parent=55 // pred_region
          %s979 = sand.u32 %s183, 1
          %s980 = scalar_lea.sflag [#allocation4], %s979
          %s981 = sand.u32 %s183, 1
          %s982 = smul.addr %s981, 4
          %s983 = scalar_lea.vmem [#allocation3], %s982
          %984 = dma.done %s980, 64
        $region60: #{mlp_critic_forward.1} parent=55 // pred_fallthru
          _
      $region56: #{mlp_critic_forward.1} parent=5 // pred_fallthru
        _
    $region6: #{mlp_critic_forward.1} parent=1 // loop_footer
      %s21 = sadd.s32 1, %s17
    $region7: #{mlp_critic_forward.1} parent=1 // loop_footer_branch
      %16 = sbr.rel target = $region3
    $region8: #{mlp_critic_forward.1} parent=1 // loop_exit
      _
    %985 = vsyncpa [#allocation4], 1
    %s986 = scalar_lea.sflag [#allocation4], 1
    %987 = vsyncpa %s986, 1

</llo_original>
